<compile_context>
chip_gen: v6e
topology: v6e:2x2x1
jax: 0.10.0
libtpu: 0.0.40
codegen_flags: <defaults>
</compile_context>

<pallas_src>
import jax
import jax.numpy as jnp
from jax.experimental import pallas as pl
from jax.experimental.pallas import tpu as pltpu


def _round_up(n, m):
    return (n + m - 1) // m * m


def snake_kernel(x_ref, alpha_ref, inv_alpha_ref, o_ref):
    # x_ref:         (1, C, tT) tile (one batch element, one lane tile)
    # alpha_ref:     (1, C, 1)  per-channel alpha, f32 (broadcast over lanes)
    # inv_alpha_ref: (1, C, 1)  precomputed 1/(alpha + 1e-9), f32
    x = x_ref[...].astype(jnp.float32)
    a = alpha_ref[...]
    inv_a = inv_alpha_ref[...]
    s = jnp.sin(a * x)
    o_ref[...] = (x + inv_a * (s * s)).astype(o_ref.dtype)


def snake1d(x, alpha, *, lane_tile=2048, block_bytes_cap=2 * 1024 * 1024):
    """x: (B, C, ...) floats; alpha: (1, C, 1). Returns same shape/dtype as x."""
    orig_shape = x.shape
    B, C = orig_shape[0], orig_shape[1]
    # Match torch: flatten everything after channels into one "T" axis.
    x3 = x.reshape(B, C, -1)
    T = x3.shape[-1]
    assert alpha.shape == (1, C, 1)

    # Hoist the per-channel reciprocal out of the hot loop (tiny, done once).
    alpha_f32 = alpha.astype(jnp.float32)
    inv_alpha = 1.0 / (alpha_f32 + 1e-9)

    # Pick a lane tile: multiple of 128, capped at ~block_bytes_cap per block so
    # 2 input + 2 output double-buffers fit default scoped VMEM on all gens.
    itemsize = x3.dtype.itemsize
    tT_cap = max(128, (block_bytes_cap // (C * itemsize)) // 128 * 128)
    tT = min(lane_tile, tT_cap, _round_up(T, 128))
    T_pad = _round_up(T, tT)
    if T_pad != T:
        # Zero-padding is safe: padded lanes are sliced off after the call.
        x3 = jnp.pad(x3, ((0, 0), (0, 0), (0, T_pad - T)))

    grid = (B, T_pad // tT)

    elems = B * C * T_pad
    cost = pl.CostEstimate(
        flops=5 * elems,
        transcendentals=elems,
        bytes_accessed=2 * elems * itemsize + 2 * C * 4,
    )

    out = pl.pallas_call(
        snake_kernel,
        out_shape=jax.ShapeDtypeStruct((B, C, T_pad), x3.dtype),
        grid_spec=pltpu.PrefetchScalarGridSpec(
            num_scalar_prefetch=0,
            grid=grid,
            in_specs=[
                pl.BlockSpec((1, C, tT), lambda b, t: (b, 0, t)),
                pl.BlockSpec((1, C, 1), lambda b, t: (0, 0, 0)),
                pl.BlockSpec((1, C, 1), lambda b, t: (0, 0, 0)),
            ],
            out_specs=pl.BlockSpec((1, C, tT), lambda b, t: (b, 0, t)),
        ),
        compiler_params=pltpu.CompilerParams(
            dimension_semantics=("parallel", "parallel"),
            vmem_limit_bytes=32 * 1024 * 1024,
        ),
        cost_estimate=cost,
    )(x3, alpha_f32, inv_alpha)

    if T_pad != T:
        out = out[:, :, :T]
    return out.reshape(orig_shape)


if __name__ == "__main__":
    key = jax.random.PRNGKey(0)
    B, C, T = 2, 4, 16

    x = jax.random.normal(key, (B, C, T), dtype=jnp.float32)
    # nn.Parameter(torch.ones(1, channels, 1)) -> deterministic ones init
    alpha = jnp.ones((1, C, 1), dtype=jnp.float32)

    out = snake1d(x, alpha)
    jax.block_until_ready(out)

    # Pure-JAX reference check of the snake activation
    ref = x + (1.0 / (alpha + 1e-9)) * jnp.sin(alpha * x) ** 2
    assert out.shape == x.shape
    assert out.dtype == x.dtype
    assert jnp.allclose(out, ref, atol=1e-6, rtol=1e-6)

    print("KERNEL_OK")
</pallas_src>

<mosaic_0001>
module attributes {stable_mosaic.version = 11 : i64} {
  func.func @snake_kernel(%arg0: i32, %arg1: i32, %arg2: memref<1x4x128xf32, #tpu.memory_space<vmem>>, %arg3: memref<1x4x1xf32, #tpu.memory_space<vmem>>, %arg4: memref<1x4x1xf32, #tpu.memory_space<vmem>>, %arg5: memref<1x4x128xf32, #tpu.memory_space<vmem>>) attributes {dimension_semantics = [#tpu.dimension_semantics<parallel>, #tpu.dimension_semantics<parallel>], iteration_bounds = array<i64: 2, 1>, scalar_prefetch = 0 : i64, scratch_operands = 0 : i64, tpu.core_type = #tpu.core_type<tc>, window_params = [{transform_indices = @transform_0, window_bounds = array<i64: 1, 4, 128>}, {pipeline_mode = #tpu.pipeline_mode<synchronous>, transform_indices = @transform_1, window_bounds = array<i64: 1, 4, 1>}, {pipeline_mode = #tpu.pipeline_mode<synchronous>, transform_indices = @transform_2, window_bounds = array<i64: 1, 4, 1>}, {transform_indices = @transform_3, window_bounds = array<i64: 1, 4, 128>}]} {
    %c0 = arith.constant 0 : index
    %c0_0 = arith.constant 0 : index
    %c0_1 = arith.constant 0 : index
    %0 = vector.load %arg2[%c0, %c0_0, %c0_1] : memref<1x4x128xf32, #tpu.memory_space<vmem>>, vector<1x4x128xf32>
    %c0_2 = arith.constant 0 : index
    %c0_3 = arith.constant 0 : index
    %c0_4 = arith.constant 0 : index
    %1 = vector.load %arg3[%c0_2, %c0_3, %c0_4] : memref<1x4x1xf32, #tpu.memory_space<vmem>>, vector<1x4x1xf32>
    %c0_5 = arith.constant 0 : index
    %c0_6 = arith.constant 0 : index
    %c0_7 = arith.constant 0 : index
    %2 = vector.load %arg4[%c0_5, %c0_6, %c0_7] : memref<1x4x1xf32, #tpu.memory_space<vmem>>, vector<1x4x1xf32>
    %3 = vector.broadcast %1 : vector<1x4x1xf32> to vector<1x4x128xf32>
    %4 = arith.mulf %3, %0 : vector<1x4x128xf32>
    %5 = math.sin %4 : vector<1x4x128xf32>
    %6 = arith.mulf %5, %5 : vector<1x4x128xf32>
    %7 = vector.broadcast %2 : vector<1x4x1xf32> to vector<1x4x128xf32>
    %8 = arith.mulf %7, %6 : vector<1x4x128xf32>
    %9 = arith.addf %0, %8 : vector<1x4x128xf32>
    %c0_8 = arith.constant 0 : index
    %c0_9 = arith.constant 0 : index
    %c0_10 = arith.constant 0 : index
    %10 = vector.load %arg5[%c0_8, %c0_9, %c0_10] : memref<1x4x128xf32, #tpu.memory_space<vmem>>, vector<1x4x128xf32>
    tpu.vector_store %arg5[%c0_8, %c0_9, %c0_10], %9 {strides = array<i32>} : memref<1x4x128xf32, #tpu.memory_space<vmem>>, vector<1x4x128xf32>,
    return
  }
  func.func @transform_0(%arg0: i32, %arg1: i32) -> (i32, i32, i32) {
    %c0_i32 = arith.constant 0 : i32
    %c0_i32_0 = arith.constant 0 : i32
    return %arg0, %c0_i32, %arg1 : i32, i32, i32
  }
  func.func @transform_1(%arg0: i32, %arg1: i32) -> (i32, i32, i32) {
    %c0_i32 = arith.constant 0 : i32
    %c0_i32_0 = arith.constant 0 : i32
    %c0_i32_1 = arith.constant 0 : i32
    %c0_i32_2 = arith.constant 0 : i32
    return %c0_i32, %c0_i32_0, %c0_i32_1 : i32, i32, i32
  }
  func.func @transform_2(%arg0: i32, %arg1: i32) -> (i32, i32, i32) {
    %c0_i32 = arith.constant 0 : i32
    %c0_i32_0 = arith.constant 0 : i32
    %c0_i32_1 = arith.constant 0 : i32
    %c0_i32_2 = arith.constant 0 : i32
    return %c0_i32, %c0_i32_0, %c0_i32_1 : i32, i32, i32
  }
  func.func @transform_3(%arg0: i32, %arg1: i32) -> (i32, i32, i32) {
    %c0_i32 = arith.constant 0 : i32
    %c0_i32_0 = arith.constant 0 : i32
    return %arg0, %c0_i32, %arg1 : i32, i32, i32
  }
}

</mosaic_0001>

<llo_original>
// kernel: tpu_custom_call.1
$region0: #{tpu_custom_call.1}
  #allocation0 [shape = 'u32[]', space=smem, size = 0x4, offset = 0x4, fixed_abs, tag = 'smem constant byte address 0x4 - core index']
  #allocation1 [shape = 'u32[144,128]{1,0:T(1,128)}', space=vmem, size = 0x12000, scoped, tag = 'internal scratch']
  %s0 = inlined_call_operand.vmem [shape: f32[2,4,128], index: 0, kind: input, shape index: {}]
  %s1 = inlined_call_operand.vmem [shape: f32[1,4,1], index: 1, kind: input, shape index: {}]
  %s2 = inlined_call_operand.vmem [shape: f32[1,4,1], index: 2, kind: input, shape index: {}]
  %s3 = inlined_call_operand.hbm [shape: f32[2,4,128], index: 3, kind: output, shape index: {}]
  %s4 = sld [smem:[#allocation0]]
  $region45: #{tpu_custom_call.1} parent=0
    _
  %s6 = ssub.s32 1, %s4
  %s7 = scalar_select 0, %s6, %s4
  $region1: #{tpu_custom_call.1} parent=0
    #allocation2 [shape = 'u8[4096]{0}', space=vmem, size = 0x1000, scoped, tag = 'output window, operand 0']
    #allocation3 [shape = 's32[2]{0}', space=sflag, size = 0x8, scoped, tag = 'scoped memory for tpu_custom_call.1']
    %8 = vsyncpa [#allocation3], 0
    %s9 = scalar_lea.sflag [#allocation3], 1
    %10 = vsyncpa %s9, 0
    loop: start=0, step=1, limit=4
    $region2: #{tpu_custom_call.1} parent=1 // loop_pre_header
      _
    $region3: #{tpu_custom_call.1} parent=1 // loop_header
      %s12 = sphi 0, %s16
      %p13 = scmp.ge.s32.totalorder %s12, 4
      %s19 = sphi 0, %s31
      %s20 = sphi 0, %s27
      %s21 = sphi 0, %s19
      %s22 = sphi 0, %s20
      %s23 = sphi 0, %s21
      %s24 = sphi 0, %s22
      %s36 = sphi 0, %s38
      %s39 = sphi 0, %s36
      %s40 = sphi 0, %s39
      %s56 = sphi 0, %s40
      %s60 = sphi 0, %s60
      %s62 = sphi 0, %s60
      %s63 = sphi 0, %s62
      %s77 = sphi 0, %s63
      %s81 = sphi 0, %s81
      %s83 = sphi 0, %s81
      %s84 = sphi 0, %s83
      %s98 = sphi 0, %s84
      %s106 = sphi 0, %s108
      %s109 = sphi 0, %s106
      %s110 = sphi 0, %s109
      %s126 = sphi 0, %s110
    $region4: #{tpu_custom_call.1} parent=1 // loop_header_branch
      %15 = sbr.rel (%p13) target = $region8
    $region5: #{tpu_custom_call.1} parent=1 // loop_body
      %s17 = ssub.s32 %s12, 1
      %s18 = ssub.s32 %s12, 2
      %s25 = sadd.s32 1, %s20
      %p26 = scmp.ge.s32.totalorder %s25, 1
      %s27 = scalar_select %p26, 0, %s25
      %s28 = sadd.s32 1, %s19
      %s29 = scalar_select %p26, %s28, %s19
      %p30 = scmp.ge.s32.totalorder %s29, 2
      %s31 = scalar_select %p30, 0, %s29
      %s32 = ssub.s32 %s19, %s31
      %s33 = ssub.s32 %s20, %s27
      %s34 = sor.u32 %s32, %s33
      %p35 = scmp.eq.s32.totalorder %s34, 0
      %s37 = sadd.s32 %s36, 1
      %s38 = scalar_select %p35, %s36, %s37
      %p41 = pneg %p35
      %p42 = scmp.eq.s32.totalorder %s12, 1
      %p43 = por %p41, %p42
      %p44 = scmp.ne.s32.totalorder %s36, %s39
      %p45 = scmp.eq.s32.totalorder %s12, 0
      %p46 = por %p44, %p45
      %p47 = scmp.ne.s32.totalorder %s36, %s39
      %p48 = scmp.eq.s32.totalorder %s17, 1
      %p49 = por %p47, %p48
      %p50 = scmp.ne.s32.totalorder %s39, %s40
      %p51 = scmp.eq.s32.totalorder %s17, 0
      %p52 = por %p50, %p51
      %p53 = scmp.ne.s32.totalorder %s39, %s40
      %p54 = scmp.eq.s32.totalorder %s18, 1
      %p55 = por %p53, %p54
      %p57 = scmp.ne.s32.totalorder %s40, %s56
      %p58 = scmp.eq.s32.totalorder %s18, 0
      %p59 = por %p57, %p58
      %s61 = sadd.s32 %s60, 1
      %p64 = scmp.eq.s32.totalorder %s12, 1
      %p65 = scmp.ne.s32.totalorder %s60, %s62
      %p66 = scmp.eq.s32.totalorder %s12, 0
      %p67 = por %p65, %p66
      %p68 = scmp.ne.s32.totalorder %s60, %s62
      %p69 = scmp.eq.s32.totalorder %s17, 1
      %p70 = por %p68, %p69
      %p71 = scmp.ne.s32.totalorder %s62, %s63
      %p72 = scmp.eq.s32.totalorder %s17, 0
      %p73 = por %p71, %p72
      %p74 = scmp.ne.s32.totalorder %s62, %s63
      %p75 = scmp.eq.s32.totalorder %s18, 1
      %p76 = por %p74, %p75
      %p78 = scmp.ne.s32.totalorder %s63, %s77
      %p79 = scmp.eq.s32.totalorder %s18, 0
      %p80 = por %p78, %p79
      %s82 = sadd.s32 %s81, 1
      %p85 = scmp.eq.s32.totalorder %s12, 1
      %p86 = scmp.ne.s32.totalorder %s81, %s83
      %p87 = scmp.eq.s32.totalorder %s12, 0
      %p88 = por %p86, %p87
      %p89 = scmp.ne.s32.totalorder %s81, %s83
      %p90 = scmp.eq.s32.totalorder %s17, 1
      %p91 = por %p89, %p90
      %p92 = scmp.ne.s32.totalorder %s83, %s84
      %p93 = scmp.eq.s32.totalorder %s17, 0
      %p94 = por %p92, %p93
      %p95 = scmp.ne.s32.totalorder %s83, %s84
      %p96 = scmp.eq.s32.totalorder %s18, 1
      %p97 = por %p95, %p96
      %p99 = scmp.ne.s32.totalorder %s84, %s98
      %p100 = scmp.eq.s32.totalorder %s18, 0
      %p101 = por %p99, %p100
      %s102 = ssub.s32 %s19, %s31
      %s103 = ssub.s32 %s20, %s27
      %s104 = sor.u32 %s102, %s103
      %p105 = scmp.eq.s32.totalorder %s104, 0
      %s107 = sadd.s32 %s106, 1
      %s108 = scalar_select %p105, %s106, %s107
      %p111 = pneg %p105
      %p112 = scmp.eq.s32.totalorder %s12, 1
      %p113 = por %p111, %p112
      %p114 = scmp.ne.s32.totalorder %s106, %s109
      %p115 = scmp.eq.s32.totalorder %s12, 0
      %p116 = por %p114, %p115
      %p117 = scmp.ne.s32.totalorder %s106, %s109
      %p118 = scmp.eq.s32.totalorder %s17, 1
      %p119 = por %p117, %p118
      %p120 = scmp.ne.s32.totalorder %s109, %s110
      %p121 = scmp.eq.s32.totalorder %s17, 0
      %p122 = por %p120, %p121
      %p123 = scmp.ne.s32.totalorder %s109, %s110
      %p124 = scmp.eq.s32.totalorder %s18, 1
      %p125 = por %p123, %p124
      %p127 = scmp.ne.s32.totalorder %s110, %s126
      %p128 = scmp.eq.s32.totalorder %s18, 0
      %p129 = por %p127, %p128
      %p130 = scmp.le.s32.totalorder 1, %s12
      %p131 = scmp.lt.s32.totalorder %s12, 3
      %p132 = pnand %p130, %p131
      %p133 = pneg %p132
      // Predicated region
      $region9: #{tpu_custom_call.1} parent=5 // pred_check
        _
      $region10: #{tpu_custom_call.1} parent=5 // pred_check_branch
        %135 = sbr.rel (%p132) target = $region12
      $region11: #{tpu_custom_call.1} parent=5 // pred_region
        %s136 = ssub.s32 %s12, 1
        // Predicated region
        $region13: #{tpu_custom_call.1} parent=11 // pred_check
          %p137 = pneg %p73
        $region14: #{tpu_custom_call.1} parent=11 // pred_check_branch
          %139 = sbr.rel (%p137) target = $region16
        $region15: #{tpu_custom_call.1} parent=11 // pred_region
          _
        $region16: #{tpu_custom_call.1} parent=11 // pred_fallthru
          _
        // Predicated region
        $region17: #{tpu_custom_call.1} parent=11 // pred_check
          %p140 = pneg %p94
        $region18: #{tpu_custom_call.1} parent=11 // pred_check_branch
          %142 = sbr.rel (%p140) target = $region20
        $region19: #{tpu_custom_call.1} parent=11 // pred_region
          _
        $region20: #{tpu_custom_call.1} parent=11 // pred_fallthru
          _
      $region12: #{tpu_custom_call.1} parent=5 // pred_fallthru
        _
      %p143 = scmp.lt.s32.totalorder %s12, 2
      // Predicated region
      $region21: #{tpu_custom_call.1} parent=5 // pred_check
        %p144 = pneg %p143
      $region22: #{tpu_custom_call.1} parent=5 // pred_check_branch
        %146 = sbr.rel (%p144) target = $region24
      $region23: #{tpu_custom_call.1} parent=5 // pred_region
        // Predicated region
        $region25: #{tpu_custom_call.1} parent=23 // pred_check
          %p147 = pneg %p46
        $region26: #{tpu_custom_call.1} parent=23 // pred_check_branch
          %149 = sbr.rel (%p147) target = $region28
        $region27: #{tpu_custom_call.1} parent=23 // pred_region
          %p150 = scmp.lt.s32.totalorder %s19, 1
          %s151 = scalar_select %p150, %s19, 1
          %p152 = scmp.lt.s32.totalorder %s20, 0
          %s153 = scalar_select %p152, %s20, 0
          %s154 = sadd.s32 %s153, %s151
          %s155 = smul.addr %s154, 4
          %s156 = scalar_lea.vmem %s0, %s155
        $region28: #{tpu_custom_call.1} parent=23 // pred_fallthru
          _
      $region24: #{tpu_custom_call.1} parent=5 // pred_fallthru
        _
      %p157 = scmp.le.s32.totalorder 1, %s12
      %p158 = scmp.lt.s32.totalorder %s12, 3
      %p159 = pnand %p157, %p158
      %p160 = pneg %p159
      // Predicated region
      $region29: #{tpu_custom_call.1} parent=5 // pred_check
        _
      $region30: #{tpu_custom_call.1} parent=5 // pred_check_branch
        %162 = sbr.rel (%p159) target = $region32
      $region31: #{tpu_custom_call.1} parent=5 // pred_region
        %s163 = ssub.s32 %s12, 1
        %p164 = scmp.lt.s32.totalorder %s21, 1
        %s165 = scalar_select %p164, %s21, 1
        %p166 = scmp.lt.s32.totalorder %s22, 0
        %s167 = scalar_select %p166, %s22, 0
        %s168 = sadd.s32 %s167, %s165
        %s169 = smul.addr %s168, 4
        %s170 = scalar_lea.vmem %s0, %s169
        %p171 = pneg %p52
        %p172 = pneg %p49
        %p173 = pneg %p73
        %p174 = pneg %p70
        %p175 = pneg %p94
        %p176 = pneg %p91
        %p177 = pneg %p122
        %p178 = pneg %p119
        %s179 = sand.u32 %s109, 1
        %s180 = scalar_lea.sflag [#allocation3], %s179
        %s181 = sand.u32 %s109, 1
        %s182 = smul.addr %s181, 4
        %s183 = scalar_lea.vmem [#allocation2], %s182
        %p184 = scmp.lt.s32.totalorder %s21, 1
        %s185 = scalar_select %p184, %s21, 1
        %p186 = scmp.lt.s32.totalorder %s22, 0
        %s187 = scalar_select %p186, %s22, 0
        %s188 = sadd.s32 %s187, %s185
        %s189 = smul.addr %s188, 4
        %s190 = scalar_lea.vmem %s0, %s189
        %v191 = vld [vmem:[%s190] sm:$0xf]
        %v192 = vld [vmem:[%s1] sm:$0xf]
        %v193 = vld [vmem:[%s2] sm:$0xf]
        %195 = vset.pattern.permute.xlu0 0
        %196 = vperm.xlu0 %195, %v192
        %v197 = vpop.permute.xlu0 %196
        %v199 = vmul.f32 %v197, %v191
        %v200 = vand.u32 2147483647, %v199
        %vm201 = vcmp.le.f32.partialorder %v200, 0.7853982
        %vm202 = vcmp.lt.s32.totalorder %v199, 0
        %v203 = vand.u32 %v199, 2139095040
        %v204 = vshrl.u32 %v203, 23
        %v205 = vsub.s32 %v204, 127
        %v206 = vand.u32 2147483647, %v199
        %v207 = vand.u32 %v206, 8388607
        %v208 = vor.u32 %v207, 8388608
        %v209 = vsub.s32 0, %v208
        %v210 = vadd.s32 %v205, 1
        %vm211 = vcmp.gt.s32.totalorder %v210, 0
        %v212 = vsel %vm211, %v210, 0
        %v213 = vshrl.u32 %v212, 5
        %v214 = vand.u32 %v212, 31
        %v215 = vsub.s32 32, %v214
        %v216 = vshrl.u32 683565275, %v215
        %v217 = vshll.u32 683565275, %v214
        %v218 = vshrl.u32 2475754826, %v215
        %v219 = vor.u32 %v217, %v218
        %v220 = vshll.u32 2475754826, %v214
        %v221 = vshrl.u32 2131351028, %v215
        %v222 = vor.u32 %v220, %v221
        %v223 = vshll.u32 2131351028, %v214
        %v224 = vshrl.u32 2102212464, %v215
        %v225 = vor.u32 %v223, %v224
        %v226 = vshll.u32 2102212464, %v214
        %v227 = vshrl.u32 920167782, %v215
        %v228 = vor.u32 %v226, %v227
        %v229 = vshll.u32 920167782, %v214
        %v230 = vshrl.u32 1326507024, %v215
        %v231 = vor.u32 %v229, %v230
        %vm232 = vcmp.lt.s32.totalorder %v213, 1
        %vm233 = vcmp.lt.s32.totalorder %v213, 2
        %vm234 = vcmp.lt.s32.totalorder %v213, 3
        %vm235 = vcmp.lt.s32.totalorder %v213, 4
        %v236 = vsel %vm232, %v216, %v219
        %v237 = vsel %vm235, %v225, 2102212464
        %v238 = vsel %vm234, %v222, %v237
        %v239 = vsel %vm233, %v236, %v238
        %v240 = vsel %vm232, %v219, %v222
        %v241 = vsel %vm235, %v228, 920167782
        %v242 = vsel %vm234, %v225, %v241
        %v243 = vsel %vm233, %v240, %v242
        %v244 = vsel %vm232, %v222, %v225
        %v245 = vsel %vm235, %v231, 1326507024
        %v246 = vsel %vm234, %v228, %v245
        %v247 = vsel %vm233, %v244, %v246
        %v248 = vshll.u32 %v208, 8
        %v249 = vmul.u32.u64.compose %v248, %v247
        %v250 = vextract.low.u32 %v249
        %v251 = vextract.high.u32 %v249
        %v252 = vmul.u32.u64.compose %v248, %v243
        %v253 = vextract.low.u32 %v252
        %v254 = vextract.high.u32 %v252
        %v255 = vmul.u32 %v248, %v239
        %v256 = vadd.s32 %v251, %v253
        %vm257 = vc.u32 %v251, %v253
        %v258 = vadd.s32 %v254, 1
        %v259 = vsel %vm257, %v258, %v254
        %v260 = vadd.s32 %v255, %v259
        %v261 = vadd.s32 %v260, 536870912
        %v262 = vshrl.u32 %v261, 30
        %v263 = vshll.u32 %v262, 30
        %v264 = vsub.s32 %v260, %v263
        %vm265 = vcmp.lt.s32.totalorder %v264, 0
        %v266 = vsub.s32 0, %v264
        %v267 = vsel %vm265, %v266, %v264
        %v268 = vclz %v267
        %v269 = vsub.s32 %v268, 2
        %vm270 = vcmp.gt.s32.totalorder 0, %v269
        %v271 = vsel %vm270, 0, %v269
        %v272 = vsub.s32 32, %v271
        %v273 = vshll.u32 %v264, %v271
        %v274 = vshrl.u32 %v256, %v272
        %v275 = vor.u32 %v273, %v274
        %v276 = vsub.s32 4294967266, %v271
        %v277 = vadd.s32 %v276, 127
        %v278 = vshll.u32 %v277, 23
        %v279 = vor.u32 4788187, %v278
        %v280 = vand.u32 2147483647, %v279
        %v282 = vcvt.s32.f32 %v275
        %v283 = vmul.f32 %v282, %v280
        %v284 = vxor.u32 %v283, 2147483648
        %v285 = vsel %vm202, %v284, %v283
        %v286 = vsub.s32 4, %v262
        %v287 = vsel %vm202, %v286, %v262
        %v288 = vsel %vm201, %v199, %v285
        %v289 = vsel %vm201, 0, %v287
        %v290 = vcosq.f32.pop %v288
        %v291 = vsinq.f32.pop %v288
        %vm292 = vweird.f32 %v199
        %v293 = vadd.s32 %v289, 3
        %v294 = vand.u32 %v293, 3
        %vm295 = vcmp.lt.s32.totalorder %v294, 2
        %vm296 = vcmp.eq.s32.totalorder %v294, 0
        %v297 = vxor.u32 %v291, 2147483648
        %v298 = vsel %vm296, %v290, %v297
        %vm299 = vcmp.eq.s32.totalorder %v294, 2
        %v300 = vxor.u32 %v290, 2147483648
        %v301 = vsel %vm299, %v300, %v291
        %v302 = vsel %vm295, %v298, %v301
        %v303 = vsel %vm292, nan, %v302
        %v304 = vmul.f32 %v303, %v303
        %306 = vset.pattern.permute.xlu0 0
        %307 = vperm.xlu0 %306, %v193
        %v308 = vpop.permute.xlu0 %307
        %v310 = vmul.f32 %v308, %v304
        %v311 = vadd.f32 %v191, %v310
        %312 = vst [vmem:[%s183] sm:$0xf] %v311
        %s313 = sand.u32 %s109, 1
        %s314 = scalar_lea.sflag [#allocation3], %s313
        %s315 = sand.u32 %s109, 1
        %s316 = smul.addr %s315, 4
        %s317 = scalar_lea.vmem [#allocation2], %s316
        // Predicated region
        $region33: #{tpu_custom_call.1} parent=31 // pred_check
          %p318 = pneg %p119
        $region34: #{tpu_custom_call.1} parent=31 // pred_check_branch
          %320 = sbr.rel (%p318) target = $region36
        $region35: #{tpu_custom_call.1} parent=31 // pred_region
          %s322 = ssub.s32 64, 64
          %323 = vsyncadd %s314, %s322
          %s324 = sadd.s32 %s22, %s21
          %s325 = smul.addr %s324, 64
          %s326 = scalar_lea.hbm %s3, %s325
          %s328 = sshll.u32 %s317, 4
          %s329 = int_to_ptr.vmem [resolvable:$true] %s328
          %331 = dma.vmem_to_hbm [thread:$0]  %s329, 64, %s326, %s314
        $region36: #{tpu_custom_call.1} parent=31 // pred_fallthru
          _
      $region32: #{tpu_custom_call.1} parent=5 // pred_fallthru
        _
      %p332 = scmp.le.s32.totalorder 2, %s12
      // Predicated region
      $region37: #{tpu_custom_call.1} parent=5 // pred_check
        %p333 = pneg %p332
      $region38: #{tpu_custom_call.1} parent=5 // pred_check_branch
        %335 = sbr.rel (%p333) target = $region40
      $region39: #{tpu_custom_call.1} parent=5 // pred_region
        %s336 = ssub.s32 %s12, 2
        // Predicated region
        $region41: #{tpu_custom_call.1} parent=39 // pred_check
          %p337 = pneg %p125
        $region42: #{tpu_custom_call.1} parent=39 // pred_check_branch
          %339 = sbr.rel (%p337) target = $region44
        $region43: #{tpu_custom_call.1} parent=39 // pred_region
          %s340 = sand.u32 %s110, 1
          %s341 = scalar_lea.sflag [#allocation3], %s340
          %s342 = sand.u32 %s110, 1
          %s343 = smul.addr %s342, 4
          %s344 = scalar_lea.vmem [#allocation2], %s343
          %345 = dma.done %s341, 64
        $region44: #{tpu_custom_call.1} parent=39 // pred_fallthru
          _
      $region40: #{tpu_custom_call.1} parent=5 // pred_fallthru
        _
    $region6: #{tpu_custom_call.1} parent=1 // loop_footer
      %s16 = sadd.s32 1, %s12
    $region7: #{tpu_custom_call.1} parent=1 // loop_footer_branch
      %11 = sbr.rel target = $region3
    $region8: #{tpu_custom_call.1} parent=1 // loop_exit
      _
    %346 = vsyncpa [#allocation3], 1
    %s347 = scalar_lea.sflag [#allocation3], 1
    %348 = vsyncpa %s347, 1

</llo_original>
